<compile_context>
chip_gen: v5e
topology: v5e:2x2
jax: 0.10.0
libtpu: 0.0.40
codegen_flags: <defaults>
</compile_context>

<pallas_src>
import functools

import jax
import jax.numpy as jnp
from jax.experimental import pallas as pl
from jax.experimental.pallas import tpu as pltpu


TN = 128          # lane width
TM_MAX = 1024     # max rows per tile (512 KiB f32 per input buffer)
NUM_CORES = 2     # leading "parallel" grid axis (used by megacore parts)


def _make_kernel(tm, steps, full_rows, rem):
    """Builds the kernel accumulating [tp, sum(p), sum(gt), sum(bce)] folds."""

    def kernel(pr_ref, gt_ref, out_ref):
        c = pl.program_id(0)
        s = pl.program_id(1)

        @pl.when(s == 0)
        def _():
            out_ref[...] = jnp.zeros_like(out_ref)

        # Logical (unclamped) row offset of this tile in the flat (R, 128) slab.
        row0 = (c * steps + s) * tm
        row_ids = row0 + jax.lax.broadcasted_iota(jnp.int32, (tm, TN), 0)
        if rem == 0:
            valid = row_ids < full_rows
        else:
            col_ids = jax.lax.broadcasted_iota(jnp.int32, (tm, TN), 1)
            valid = (row_ids < full_rows) | (
                (row_ids == full_rows) & (col_ids < rem))

        # Mask invalid elements so every partial sum contributes exactly 0:
        #   x = -1e30 -> sigmoid(x) = 0 and bce(x, 0) = 0 ; y = 0.
        x = jnp.where(valid, pr_ref[...].astype(jnp.float32), -1e30)
        y = jnp.where(valid, gt_ref[...].astype(jnp.float32), 0.0)

        # sigmoid and BCE-with-logits share exp(-|x|).
        e = jnp.exp(-jnp.abs(x))
        p = jnp.where(x >= 0.0, 1.0, e) / (1.0 + e)        # sigmoid(x)
        bce = jnp.maximum(x, 0.0) - x * y + jnp.log1p(e)   # stable BCEWithLogits

        def fold(v):  # (tm, TN) -> (8, TN): pure vreg-wise adds, no XLU
            return jnp.sum(v.reshape(tm // 8, 8, TN), axis=0)

        out_ref[0] += fold(y * p)   # tp
        out_ref[1] += fold(p)       # sum(sigmoid(pr))
        out_ref[2] += fold(y)       # sum(gt)
        out_ref[3] += fold(bce)     # sum(bce elementwise)

    return kernel


def _partial_sums(pr2, gt2, n_elem):
    """pr2/gt2: (R, 128) slabs, native dtype. Returns (NUM_CORES, 4, 8, 128) f32."""
    slab_rows = pr2.shape[0]                       # >= 8, static
    tm = min(TM_MAX, (slab_rows // 8) * 8)         # multiple of 8, <= slab_rows
    nblocks = pl.cdiv(slab_rows, tm)
    steps = pl.cdiv(nblocks, NUM_CORES)

    full_rows = n_elem // TN
    rem = n_elem % TN

    def in_map(c, s):
        # Clamp so the DMA never addresses past the slab; over-read (duplicate)
        # tiles are fully masked inside the kernel via the logical row index.
        return (jnp.minimum(c * steps + s, nblocks - 1), 0)

    out = pl.pallas_call(
        _make_kernel(tm, steps, full_rows, rem),
        out_shape=jax.ShapeDtypeStruct((NUM_CORES * 4, 8, TN), jnp.float32),
        grid_spec=pltpu.PrefetchScalarGridSpec(
            num_scalar_prefetch=0,
            grid=(NUM_CORES, steps),
            in_specs=[
                pl.BlockSpec((tm, TN), in_map),
                pl.BlockSpec((tm, TN), in_map),
            ],
            out_specs=pl.BlockSpec((4, 8, TN), lambda c, s: (c, 0, 0)),
        ),
        compiler_params=pltpu.CompilerParams(
            dimension_semantics=("parallel", "arbitrary"),
        ),
    )(pr2, gt2)
    return out.reshape(NUM_CORES, 4, 8, TN)


@functools.partial(jax.jit, static_argnames=("eps", "lambda_dice", "lambda_bce"))
def bce_dice_loss(y_pr, y_gt, eps=1e-07, lambda_dice=1.0, lambda_bce=1.0):
    """BCEDiceLoss forward (activation='sigmoid', beta=1, threshold=None)."""
    n_elem = y_pr.size

    pr = y_pr.reshape(-1)   # keep native dtypes; cast happens in VMEM
    gt = y_gt.reshape(-1)

    # Lane padding only when numel is not a multiple of 128 (rare for NCHW
    # feature maps).  Pad VALUES are irrelevant: in-kernel masking makes them
    # contribute exactly 0 to every partial sum.
    lane_pad = (-n_elem) % TN
    if lane_pad:
        pr = jnp.pad(pr, (0, lane_pad))
        gt = jnp.pad(gt, (0, lane_pad))

    rows = (n_elem + lane_pad) // TN
    pr2 = pr.reshape(rows, TN)   # free: row-major contiguous reshape
    gt2 = gt.reshape(rows, TN)

    if rows < 8:  # tiny inputs: make the slab at least one (8,128) tile tall
        pr2 = jnp.pad(pr2, ((0, 8 - rows), (0, 0)))
        gt2 = jnp.pad(gt2, ((0, 8 - rows), (0, 0)))

    partials = _partial_sums(pr2, gt2, n_elem)
    sums = jnp.sum(partials, axis=(0, 2, 3))   # (4,) — tiny wrapper-side reduce
    tp, sum_p, sum_g, sum_bce = sums[0], sums[1], sums[2], sums[3]

    fp = sum_p - tp
    fn = sum_g - tp
    beta2 = 1.0  # beta = 1
    score = ((1.0 + beta2) * tp + eps) / ((1.0 + beta2) * tp + beta2 * fn + fp + eps)
    dice = 1.0 - score

    bce = sum_bce / jnp.float32(n_elem)

    return lambda_dice * dice + lambda_bce * bce


def _reference(y_pr, y_gt, eps=1e-07):
    """Pure-JAX reference identical to the PyTorch forward."""
    x = y_pr.astype(jnp.float32)
    y = y_gt.astype(jnp.float32)
    p = jax.nn.sigmoid(x)
    tp = jnp.sum(y * p)
    fp = jnp.sum(p) - tp
    fn = jnp.sum(y) - tp
    score = (2.0 * tp + eps) / (2.0 * tp + fn + fp + eps)
    dice = 1.0 - score
    bce = jnp.mean(jnp.maximum(x, 0.0) - x * y + jnp.log1p(jnp.exp(-jnp.abs(x))))
    return dice + bce


if __name__ == "__main__":
    key = jax.random.PRNGKey(0)
    k1, k2 = jax.random.split(key)

    # NCHW, matching typical segmentation-head output shapes.
    shape = (2, 4, 16, 16)
    y_pr = jax.random.normal(k1, shape, dtype=jnp.float32)            # logits
    y_gt = (jax.random.uniform(k2, shape) > 0.5).astype(jnp.float32)  # binary mask

    loss = bce_dice_loss(y_pr, y_gt)
    loss = jax.block_until_ready(loss)
    ref = _reference(y_pr, y_gt)
    assert jnp.allclose(loss, ref, rtol=1e-5, atol=1e-5), (loss, ref)

    # Non-multiple-of-128 shape exercises the in-kernel tail masking path.
    shape2 = (1, 3, 7, 5)
    y_pr2 = jax.random.normal(k1, shape2, dtype=jnp.float32)
    y_gt2 = (jax.random.uniform(k2, shape2) > 0.5).astype(jnp.float32)
    loss2 = jax.block_until_ready(bce_dice_loss(y_pr2, y_gt2))
    ref2 = _reference(y_pr2, y_gt2)
    assert jnp.allclose(loss2, ref2, rtol=1e-5, atol=1e-5), (loss2, ref2)

    print("KERNEL_OK")
</pallas_src>

<mosaic_0001>
module attributes {stable_mosaic.version = 11 : i64} {
  func.func @kernel(%arg0: i32, %arg1: i32, %arg2: memref<16x128xf32, #tpu.memory_space<vmem>>, %arg3: memref<16x128xf32, #tpu.memory_space<vmem>>, %arg4: memref<4x8x128xf32, #tpu.memory_space<vmem>>) attributes {dimension_semantics = [#tpu.dimension_semantics<parallel>, #tpu.dimension_semantics<arbitrary>], iteration_bounds = array<i64: 2, 1>, scalar_prefetch = 0 : i64, scratch_operands = 0 : i64, tpu.core_type = #tpu.core_type<tc>, window_params = [{transform_indices = @transform_0, window_bounds = array<i64: 16, 128>}, {transform_indices = @transform_1, window_bounds = array<i64: 16, 128>}, {transform_indices = @transform_2, window_bounds = array<i64: 4, 8, 128>}]} {
    %c0_i32 = arith.constant 0 : i32
    %0 = arith.cmpi eq, %arg1, %c0_i32 : i32
    %1 = arith.extui %0 : i1 to i32
    %c0_i32_0 = arith.constant 0 : i32
    %2 = arith.cmpi ne, %1, %c0_i32_0 : i32
    scf.if %2 {
      %cst_36 = arith.constant 0.000000e+00 : f32
      %67 = vector.broadcast %cst_36 : f32 to vector<4x8x128xf32>
      %c0_37 = arith.constant 0 : index
      %c0_38 = arith.constant 0 : index
      %c0_39 = arith.constant 0 : index
      %68 = vector.load %arg4[%c0_37, %c0_38, %c0_39] : memref<4x8x128xf32, #tpu.memory_space<vmem>>, vector<4x8x128xf32>
      tpu.vector_store %arg4[%c0_37, %c0_38, %c0_39], %67 {strides = array<i32>} : memref<4x8x128xf32, #tpu.memory_space<vmem>>, vector<4x8x128xf32>,
    } else {
    }
    %c1_i32 = arith.constant 1 : i32
    %3 = arith.muli %arg0, %c1_i32 : i32
    %4 = arith.addi %3, %arg1 : i32
    %c16_i32 = arith.constant 16 : i32
    %5 = arith.muli %4, %c16_i32 : i32
    %6 = tpu.iota {dimensions = array<i32: 0>} : vector<16x128xi32>
    %7 = vector.broadcast %5 : i32 to vector<16x128xi32>
    %8 = arith.addi %7, %6 : vector<16x128xi32>
    %c16_i32_1 = arith.constant 16 : i32
    %9 = vector.broadcast %c16_i32_1 : i32 to vector<16x128xi32>
    %10 = arith.cmpi slt, %8, %9 : vector<16x128xi32>
    %c0 = arith.constant 0 : index
    %c0_2 = arith.constant 0 : index
    %11 = vector.load %arg2[%c0, %c0_2] : memref<16x128xf32, #tpu.memory_space<vmem>>, vector<16x128xf32>
    %cst = arith.constant -1.000000e+30 : f32
    %12 = vector.broadcast %cst : f32 to vector<16x128xf32>
    %13 = arith.select %10, %11, %12 : vector<16x128xi1>, vector<16x128xf32>
    %c0_3 = arith.constant 0 : index
    %c0_4 = arith.constant 0 : index
    %14 = vector.load %arg3[%c0_3, %c0_4] : memref<16x128xf32, #tpu.memory_space<vmem>>, vector<16x128xf32>
    %cst_5 = arith.constant 0.000000e+00 : f32
    %15 = vector.broadcast %cst_5 : f32 to vector<16x128xf32>
    %16 = arith.select %10, %14, %15 : vector<16x128xi1>, vector<16x128xf32>
    %17 = math.absf %13 : vector<16x128xf32>
    %cst_6 = arith.constant 0.000000e+00 : f32
    %18 = vector.broadcast %cst_6 : f32 to vector<16x128xf32>
    %19 = arith.subf %18, %17 : vector<16x128xf32>
    %20 = math.exp %19 : vector<16x128xf32>
    %cst_7 = arith.constant 0.000000e+00 : f32
    %21 = vector.broadcast %cst_7 : f32 to vector<16x128xf32>
    %22 = arith.cmpf oge, %13, %21 : vector<16x128xf32>
    %cst_8 = arith.constant 1.000000e+00 : f32
    %23 = vector.broadcast %cst_8 : f32 to vector<16x128xf32>
    %24 = arith.select %22, %23, %20 : vector<16x128xi1>, vector<16x128xf32>
    %cst_9 = arith.constant 1.000000e+00 : f32
    %25 = vector.broadcast %cst_9 : f32 to vector<16x128xf32>
    %26 = arith.addf %25, %20 : vector<16x128xf32>
    %27 = arith.divf %24, %26 : vector<16x128xf32>
    %cst_10 = arith.constant 0.000000e+00 : f32
    %28 = vector.broadcast %cst_10 : f32 to vector<16x128xf32>
    %29 = arith.maximumf %13, %28 : vector<16x128xf32>
    %30 = arith.mulf %13, %16 : vector<16x128xf32>
    %31 = arith.subf %29, %30 : vector<16x128xf32>
    %32 = math.log1p %20 : vector<16x128xf32>
    %33 = arith.addf %31, %32 : vector<16x128xf32>
    %c0_11 = arith.constant 0 : index
    %c0_12 = arith.constant 0 : index
    %c0_13 = arith.constant 0 : index
    %34 = vector.load %arg4[%c0_11, %c0_12, %c0_13] : memref<4x8x128xf32, #tpu.memory_space<vmem>>, vector<1x8x128xf32>
    %35 = vector.shape_cast %34 : vector<1x8x128xf32> to vector<8x128xf32>
    %36 = arith.mulf %16, %27 : vector<16x128xf32>
    %37 = vector.shape_cast %36 : vector<16x128xf32> to vector<2x8x128xf32>
    %cst_14 = arith.constant dense<0.000000e+00> : vector<8x128xf32>
    %38 = vector.multi_reduction <add>, %37, %cst_14 [0] : vector<2x8x128xf32> to vector<8x128xf32>
    %39 = arith.addf %35, %38 : vector<8x128xf32>
    %c0_15 = arith.constant 0 : index
    %c0_16 = arith.constant 0 : index
    %c0_17 = arith.constant 0 : index
    %40 = vector.load %arg4[%c0_15, %c0_16, %c0_17] : memref<4x8x128xf32, #tpu.memory_space<vmem>>, vector<1x8x128xf32>
    %41 = vector.shape_cast %40 : vector<1x8x128xf32> to vector<8x128xf32>
    %42 = vector.shape_cast %39 : vector<8x128xf32> to vector<1x8x128xf32>
    tpu.vector_store %arg4[%c0_15, %c0_16, %c0_17], %42 {strides = array<i32>} : memref<4x8x128xf32, #tpu.memory_space<vmem>>, vector<1x8x128xf32>,
    %c1 = arith.constant 1 : index
    %c0_18 = arith.constant 0 : index
    %c0_19 = arith.constant 0 : index
    %43 = vector.load %arg4[%c1, %c0_18, %c0_19] : memref<4x8x128xf32, #tpu.memory_space<vmem>>, vector<1x8x128xf32>
    %44 = vector.shape_cast %43 : vector<1x8x128xf32> to vector<8x128xf32>
    %45 = vector.shape_cast %27 : vector<16x128xf32> to vector<2x8x128xf32>
    %cst_20 = arith.constant dense<0.000000e+00> : vector<8x128xf32>
    %46 = vector.multi_reduction <add>, %45, %cst_20 [0] : vector<2x8x128xf32> to vector<8x128xf32>
    %47 = arith.addf %44, %46 : vector<8x128xf32>
    %c1_21 = arith.constant 1 : index
    %c0_22 = arith.constant 0 : index
    %c0_23 = arith.constant 0 : index
    %48 = vector.load %arg4[%c1_21, %c0_22, %c0_23] : memref<4x8x128xf32, #tpu.memory_space<vmem>>, vector<1x8x128xf32>
    %49 = vector.shape_cast %48 : vector<1x8x128xf32> to vector<8x128xf32>
    %50 = vector.shape_cast %47 : vector<8x128xf32> to vector<1x8x128xf32>
    tpu.vector_store %arg4[%c1_21, %c0_22, %c0_23], %50 {strides = array<i32>} : memref<4x8x128xf32, #tpu.memory_space<vmem>>, vector<1x8x128xf32>,
    %c2 = arith.constant 2 : index
    %c0_24 = arith.constant 0 : index
    %c0_25 = arith.constant 0 : index
    %51 = vector.load %arg4[%c2, %c0_24, %c0_25] : memref<4x8x128xf32, #tpu.memory_space<vmem>>, vector<1x8x128xf32>
    %52 = vector.shape_cast %51 : vector<1x8x128xf32> to vector<8x128xf32>
    %53 = vector.shape_cast %16 : vector<16x128xf32> to vector<2x8x128xf32>
    %cst_26 = arith.constant dense<0.000000e+00> : vector<8x128xf32>
    %54 = vector.multi_reduction <add>, %53, %cst_26 [0] : vector<2x8x128xf32> to vector<8x128xf32>
    %55 = arith.addf %52, %54 : vector<8x128xf32>
    %c2_27 = arith.constant 2 : index
    %c0_28 = arith.constant 0 : index
    %c0_29 = arith.constant 0 : index
    %56 = vector.load %arg4[%c2_27, %c0_28, %c0_29] : memref<4x8x128xf32, #tpu.memory_space<vmem>>, vector<1x8x128xf32>
    %57 = vector.shape_cast %56 : vector<1x8x128xf32> to vector<8x128xf32>
    %58 = vector.shape_cast %55 : vector<8x128xf32> to vector<1x8x128xf32>
    tpu.vector_store %arg4[%c2_27, %c0_28, %c0_29], %58 {strides = array<i32>} : memref<4x8x128xf32, #tpu.memory_space<vmem>>, vector<1x8x128xf32>,
    %c3 = arith.constant 3 : index
    %c0_30 = arith.constant 0 : index
    %c0_31 = arith.constant 0 : index
    %59 = vector.load %arg4[%c3, %c0_30, %c0_31] : memref<4x8x128xf32, #tpu.memory_space<vmem>>, vector<1x8x128xf32>
    %60 = vector.shape_cast %59 : vector<1x8x128xf32> to vector<8x128xf32>
    %61 = vector.shape_cast %33 : vector<16x128xf32> to vector<2x8x128xf32>
    %cst_32 = arith.constant dense<0.000000e+00> : vector<8x128xf32>
    %62 = vector.multi_reduction <add>, %61, %cst_32 [0] : vector<2x8x128xf32> to vector<8x128xf32>
    %63 = arith.addf %60, %62 : vector<8x128xf32>
    %c3_33 = arith.constant 3 : index
    %c0_34 = arith.constant 0 : index
    %c0_35 = arith.constant 0 : index
    %64 = vector.load %arg4[%c3_33, %c0_34, %c0_35] : memref<4x8x128xf32, #tpu.memory_space<vmem>>, vector<1x8x128xf32>
    %65 = vector.shape_cast %64 : vector<1x8x128xf32> to vector<8x128xf32>
    %66 = vector.shape_cast %63 : vector<8x128xf32> to vector<1x8x128xf32>
    tpu.vector_store %arg4[%c3_33, %c0_34, %c0_35], %66 {strides = array<i32>} : memref<4x8x128xf32, #tpu.memory_space<vmem>>, vector<1x8x128xf32>,
    return
  }
  func.func @transform_0(%arg0: i32, %arg1: i32) -> (i32, i32) {
    %c1_i32 = arith.constant 1 : i32
    %0 = arith.muli %arg0, %c1_i32 : i32
    %1 = arith.addi %0, %arg1 : i32
    %c0_i32 = arith.constant 0 : i32
    %2 = arith.minsi %1, %c0_i32 : i32
    %c0_i32_0 = arith.constant 0 : i32
    %c0_i32_1 = arith.constant 0 : i32
    return %2, %c0_i32_0 : i32, i32
  }
  func.func @transform_1(%arg0: i32, %arg1: i32) -> (i32, i32) {
    %c1_i32 = arith.constant 1 : i32
    %0 = arith.muli %arg0, %c1_i32 : i32
    %1 = arith.addi %0, %arg1 : i32
    %c0_i32 = arith.constant 0 : i32
    %2 = arith.minsi %1, %c0_i32 : i32
    %c0_i32_0 = arith.constant 0 : i32
    %c0_i32_1 = arith.constant 0 : i32
    return %2, %c0_i32_0 : i32, i32
  }
  func.func @transform_2(%arg0: i32, %arg1: i32) -> (i32, i32, i32) {
    %c0_i32 = arith.constant 0 : i32
    %c0_i32_0 = arith.constant 0 : i32
    %c0_i32_1 = arith.constant 0 : i32
    return %arg0, %c0_i32, %c0_i32_0 : i32, i32, i32
  }
}

</mosaic_0001>

<llo_original>
// kernel: bce_dice_loss.1
$region0: #{bce_dice_loss.1}
  #allocation0 [shape = 'u32[]', space=smem, size = 0x4, offset = 0x4, fixed_abs, tag = 'smem constant byte address 0x4 - core index']
  #allocation1 [shape = 'u32[72,128]{1,0:T(1,128)}', space=vmem, size = 0x9000, scoped, tag = 'internal scratch']
  %s0 = inlined_call_operand.vmem [shape: f32[16,128], index: 0, kind: input, shape index: {}]
  %s1 = inlined_call_operand.vmem [shape: f32[16,128], index: 1, kind: input, shape index: {}]
  %s2 = inlined_call_operand.vmem [shape: f32[8,8,128], index: 2, kind: output, shape index: {}]
  %s3 = sld [smem:[#allocation0]]
  $region45: #{bce_dice_loss.1} parent=0
    _
  %s5 = ssub.s32 1, %s3
  %s6 = scalar_select 0, %s5, %s3
  loop: start=0, step=1, limit=4
  $region2: #{bce_dice_loss.1} parent=0 // loop_pre_header
    _
  $region3: #{bce_dice_loss.1} parent=0 // loop_header
    %s8 = sphi 0, %s12
    %p9 = scmp.ge.s32.totalorder %s8, 4
    %s15 = sphi 0, %s27
    %s16 = sphi 0, %s23
    %s17 = sphi 0, %s15
    %s18 = sphi 0, %s16
    %s19 = sphi 0, %s17
    %s20 = sphi 0, %s18
    %s36 = sphi 0, %s38
    %s39 = sphi 0, %s36
    %s40 = sphi 0, %s39
    %s56 = sphi 0, %s40
    %s68 = sphi 0, %s70
    %s71 = sphi 0, %s68
    %s72 = sphi 0, %s71
    %s88 = sphi 0, %s72
    %s94 = sphi 0, %s96
    %s97 = sphi 0, %s94
    %s98 = sphi 0, %s97
    %s114 = sphi 0, %s98
  $region4: #{bce_dice_loss.1} parent=0 // loop_header_branch
    %11 = sbr.rel (%p9) target = $region8
  $region5: #{bce_dice_loss.1} parent=0 // loop_body
    %s13 = ssub.s32 %s8, 1
    %s14 = ssub.s32 %s8, 2
    %s21 = sadd.s32 1, %s16
    %p22 = scmp.ge.s32.totalorder %s21, 1
    %s23 = scalar_select %p22, 0, %s21
    %s24 = sadd.s32 1, %s15
    %s25 = scalar_select %p22, %s24, %s15
    %p26 = scmp.ge.s32.totalorder %s25, 2
    %s27 = scalar_select %p26, 0, %s25
    %s28 = sadd.s32 %s15, %s16
    %p29 = scmp.lt.s32.totalorder %s28, 0
    %s30 = scalar_select %p29, %s28, 0
    %s31 = sadd.s32 %s27, %s23
    %p32 = scmp.lt.s32.totalorder %s31, 0
    %s33 = scalar_select %p32, %s31, 0
    %s34 = ssub.s32 %s30, %s33
    %p35 = scmp.eq.s32.totalorder %s34, 0
    %s37 = sadd.s32 %s36, 1
    %s38 = scalar_select %p35, %s36, %s37
    %p41 = pneg %p35
    %p42 = scmp.eq.s32.totalorder %s8, 1
    %p43 = por %p41, %p42
    %p44 = scmp.ne.s32.totalorder %s36, %s39
    %p45 = scmp.eq.s32.totalorder %s8, 0
    %p46 = por %p44, %p45
    %p47 = scmp.ne.s32.totalorder %s36, %s39
    %p48 = scmp.eq.s32.totalorder %s13, 1
    %p49 = por %p47, %p48
    %p50 = scmp.ne.s32.totalorder %s39, %s40
    %p51 = scmp.eq.s32.totalorder %s13, 0
    %p52 = por %p50, %p51
    %p53 = scmp.ne.s32.totalorder %s39, %s40
    %p54 = scmp.eq.s32.totalorder %s14, 1
    %p55 = por %p53, %p54
    %p57 = scmp.ne.s32.totalorder %s40, %s56
    %p58 = scmp.eq.s32.totalorder %s14, 0
    %p59 = por %p57, %p58
    %s60 = sadd.s32 %s15, %s16
    %p61 = scmp.lt.s32.totalorder %s60, 0
    %s62 = scalar_select %p61, %s60, 0
    %s63 = sadd.s32 %s27, %s23
    %p64 = scmp.lt.s32.totalorder %s63, 0
    %s65 = scalar_select %p64, %s63, 0
    %s66 = ssub.s32 %s62, %s65
    %p67 = scmp.eq.s32.totalorder %s66, 0
    %s69 = sadd.s32 %s68, 1
    %s70 = scalar_select %p67, %s68, %s69
    %p73 = pneg %p67
    %p74 = scmp.eq.s32.totalorder %s8, 1
    %p75 = por %p73, %p74
    %p76 = scmp.ne.s32.totalorder %s68, %s71
    %p77 = scmp.eq.s32.totalorder %s8, 0
    %p78 = por %p76, %p77
    %p79 = scmp.ne.s32.totalorder %s68, %s71
    %p80 = scmp.eq.s32.totalorder %s13, 1
    %p81 = por %p79, %p80
    %p82 = scmp.ne.s32.totalorder %s71, %s72
    %p83 = scmp.eq.s32.totalorder %s13, 0
    %p84 = por %p82, %p83
    %p85 = scmp.ne.s32.totalorder %s71, %s72
    %p86 = scmp.eq.s32.totalorder %s14, 1
    %p87 = por %p85, %p86
    %p89 = scmp.ne.s32.totalorder %s72, %s88
    %p90 = scmp.eq.s32.totalorder %s14, 0
    %p91 = por %p89, %p90
    %s92 = ssub.s32 %s15, %s27
    %p93 = scmp.eq.s32.totalorder %s92, 0
    %s95 = sadd.s32 %s94, 1
    %s96 = scalar_select %p93, %s94, %s95
    %p99 = pneg %p93
    %p100 = scmp.eq.s32.totalorder %s8, 1
    %p101 = por %p99, %p100
    %p102 = scmp.ne.s32.totalorder %s94, %s97
    %p103 = scmp.eq.s32.totalorder %s8, 0
    %p104 = por %p102, %p103
    %p105 = scmp.ne.s32.totalorder %s94, %s97
    %p106 = scmp.eq.s32.totalorder %s13, 1
    %p107 = por %p105, %p106
    %p108 = scmp.ne.s32.totalorder %s97, %s98
    %p109 = scmp.eq.s32.totalorder %s13, 0
    %p110 = por %p108, %p109
    %p111 = scmp.ne.s32.totalorder %s97, %s98
    %p112 = scmp.eq.s32.totalorder %s14, 1
    %p113 = por %p111, %p112
    %p115 = scmp.ne.s32.totalorder %s98, %s114
    %p116 = scmp.eq.s32.totalorder %s14, 0
    %p117 = por %p115, %p116
    %p118 = scmp.le.s32.totalorder 1, %s8
    %p119 = scmp.lt.s32.totalorder %s8, 3
    %p120 = pnand %p118, %p119
    %p121 = pneg %p120
    // Predicated region
    $region9: #{bce_dice_loss.1} parent=5 // pred_check
      _
    $region10: #{bce_dice_loss.1} parent=5 // pred_check_branch
      %123 = sbr.rel (%p120) target = $region12
    $region11: #{bce_dice_loss.1} parent=5 // pred_region
      %s124 = ssub.s32 %s8, 1
    $region12: #{bce_dice_loss.1} parent=5 // pred_fallthru
      _
    %p125 = scmp.lt.s32.totalorder %s8, 2
    // Predicated region
    $region13: #{bce_dice_loss.1} parent=5 // pred_check
      %p126 = pneg %p125
    $region14: #{bce_dice_loss.1} parent=5 // pred_check_branch
      %128 = sbr.rel (%p126) target = $region16
    $region15: #{bce_dice_loss.1} parent=5 // pred_region
      // Predicated region
      $region17: #{bce_dice_loss.1} parent=15 // pred_check
        %p129 = pneg %p46
      $region18: #{bce_dice_loss.1} parent=15 // pred_check_branch
        %131 = sbr.rel (%p129) target = $region20
      $region19: #{bce_dice_loss.1} parent=15 // pred_region
        %s132 = sadd.s32 %s15, %s16
        %p133 = scmp.lt.s32.totalorder %s132, 0
        %s134 = scalar_select %p133, %s132, 0
        %s135 = smul.u32 2, %s134
        %p136 = scmp.lt.s32.totalorder %s135, 1
        %s137 = scalar_select %p136, %s135, 1
        %s138 = smul.addr %s137, 8
        %s139 = scalar_lea.vmem %s0, %s138
        %s140 = sadd.s32 %s15, %s16
        %p141 = scmp.lt.s32.totalorder %s140, 0
        %s142 = scalar_select %p141, %s140, 0
        %s143 = smul.u32 2, %s142
      $region20: #{bce_dice_loss.1} parent=15 // pred_fallthru
        _
      // Predicated region
      $region21: #{bce_dice_loss.1} parent=15 // pred_check
        %p144 = pneg %p78
      $region22: #{bce_dice_loss.1} parent=15 // pred_check_branch
        %146 = sbr.rel (%p144) target = $region24
      $region23: #{bce_dice_loss.1} parent=15 // pred_region
        %s147 = sadd.s32 %s15, %s16
        %p148 = scmp.lt.s32.totalorder %s147, 0
        %s149 = scalar_select %p148, %s147, 0
        %s150 = smul.u32 2, %s149
        %p151 = scmp.lt.s32.totalorder %s150, 1
        %s152 = scalar_select %p151, %s150, 1
        %s153 = smul.addr %s152, 8
        %s154 = scalar_lea.vmem %s1, %s153
        %s155 = sadd.s32 %s15, %s16
        %p156 = scmp.lt.s32.totalorder %s155, 0
        %s157 = scalar_select %p156, %s155, 0
        %s158 = smul.u32 2, %s157
      $region24: #{bce_dice_loss.1} parent=15 // pred_fallthru
        _
    $region16: #{bce_dice_loss.1} parent=5 // pred_fallthru
      _
    %p159 = scmp.le.s32.totalorder 1, %s8
    %p160 = scmp.lt.s32.totalorder %s8, 3
    %p161 = pnand %p159, %p160
    %p162 = pneg %p161
    // Predicated region
    $region25: #{bce_dice_loss.1} parent=5 // pred_check
      _
    $region26: #{bce_dice_loss.1} parent=5 // pred_check_branch
      %164 = sbr.rel (%p161) target = $region28
    $region27: #{bce_dice_loss.1} parent=5 // pred_region
      %s165 = ssub.s32 %s8, 1
      %s166 = sadd.s32 %s17, %s18
      %p167 = scmp.lt.s32.totalorder %s166, 0
      %s168 = scalar_select %p167, %s166, 0
      %s169 = smul.u32 2, %s168
      %p170 = scmp.lt.s32.totalorder %s169, 1
      %s171 = scalar_select %p170, %s169, 1
      %s172 = smul.addr %s171, 8
      %s173 = scalar_lea.vmem %s0, %s172
      %p174 = pneg %p52
      %p175 = pneg %p49
      %s176 = sadd.s32 %s17, %s18
      %p177 = scmp.lt.s32.totalorder %s176, 0
      %s178 = scalar_select %p177, %s176, 0
      %s179 = smul.u32 2, %s178
      %p180 = scmp.lt.s32.totalorder %s179, 1
      %s181 = scalar_select %p180, %s179, 1
      %s182 = smul.addr %s181, 8
      %s183 = scalar_lea.vmem %s1, %s182
      %p184 = pneg %p84
      %p185 = pneg %p81
      %p186 = pneg %p110
      %p187 = pneg %p107
      %s188 = smul.u32 4, %s17
      %p189 = scmp.lt.s32.totalorder %s188, 7
      %s190 = scalar_select %p189, %s188, 7
      %s191 = smul.addr %s190, 8
      %s192 = scalar_lea.vmem %s2, %s191
      %s193 = sadd.s32 %s17, %s18
      %p194 = scmp.lt.s32.totalorder %s193, 0
      %s195 = scalar_select %p194, %s193, 0
      %s196 = smul.u32 2, %s195
      %p197 = scmp.lt.s32.totalorder %s196, 1
      %s198 = scalar_select %p197, %s196, 1
      %s199 = smul.addr %s198, 8
      %s200 = scalar_lea.vmem %s0, %s199
      %s201 = sadd.s32 %s17, %s18
      %p202 = scmp.lt.s32.totalorder %s201, 0
      %s203 = scalar_select %p202, %s201, 0
      %s204 = smul.u32 2, %s203
      %s205 = sadd.s32 %s17, %s18
      %p206 = scmp.lt.s32.totalorder %s205, 0
      %s207 = scalar_select %p206, %s205, 0
      %s208 = smul.u32 2, %s207
      %p209 = scmp.lt.s32.totalorder %s208, 1
      %s210 = scalar_select %p209, %s208, 1
      %s211 = smul.addr %s210, 8
      %s212 = scalar_lea.vmem %s1, %s211
      %s213 = sadd.s32 %s17, %s18
      %p214 = scmp.lt.s32.totalorder %s213, 0
      %s215 = scalar_select %p214, %s213, 0
      %s216 = smul.u32 2, %s215
      %s217 = smul.u32 4, %s17
      %p218 = scmp.lt.s32.totalorder %s217, 7
      %s219 = scalar_select %p218, %s217, 7
      %s220 = smul.addr %s219, 8
      %s221 = scalar_lea.vmem %s2, %s220
      %s222 = smul.u32 4, %s17
      %p223 = scmp.eq.s32.totalorder %s18, 0
      // Predicated region
      $region29: #{bce_dice_loss.1} parent=27 // pred_check
        %p224 = pneg %p223
      $region30: #{bce_dice_loss.1} parent=27 // pred_check_branch
        %226 = sbr.rel (%p224) target = $region32
      $region31: #{bce_dice_loss.1} parent=27 // pred_region
        %227 = vst [vmem:[%s221] sm:$0xff] 0.0
        %228 = vst [vmem:[%s221 + $0x8] sm:$0xff] 0.0
        %229 = vst [vmem:[%s221 + $0x10] sm:$0xff] 0.0
        %230 = vst [vmem:[%s221 + $0x18] sm:$0xff] 0.0
      $region32: #{bce_dice_loss.1} parent=27 // pred_fallthru
        _
      %s231 = sadd.s32 %s17, %s18
      %s232 = smul.u32 %s231, 16
      %v233 = vlaneseq
      %v234 = vshrl.u32 %v233, 7
      %v235 = vadd.s32 %v234, 8
      %v236 = vstv %s232
      %v237 = vadd.s32 %v236, %v234
      %v238 = vadd.s32 %v236, %v235
      %vm239 = vcmp.lt.s32.totalorder %v237, 16
      %vm240 = vcmp.lt.s32.totalorder %v238, 16
      %v241 = vld [vmem:[%s200] sm:$0xff]
      %v242 = vld [vmem:[%s200 + $0x8] sm:$0xff]
      %v243 = vsel %vm239, %v241, -1e+30
      %v244 = vsel %vm240, %v242, -1e+30
      %v245 = vld [vmem:[%s212] sm:$0xff]
      %v246 = vld [vmem:[%s212 + $0x8] sm:$0xff]
      %v247 = vsel %vm239, %v245, 0.0
      %v248 = vsel %vm240, %v246, 0.0
      %v249 = vand.u32 2147483647, %v243
      %v250 = vand.u32 2147483647, %v244
      %v251 = vsub.f32 0.0, %v249
      %v252 = vsub.f32 0.0, %v250
      %v253 = vmul.f32 %v251, 1.442695
      %v254 = vpow.pop %v253
      %v255 = vmul.f32 %v252, 1.442695
      %v256 = vpow.pop %v255
      %vm257 = vcmp.ge.f32.partialorder %v243, 0.0
      %vm258 = vcmp.ge.f32.partialorder %v244, 0.0
      %v259 = vsel %vm257, 1.0, %v254
      %v260 = vsel %vm258, 1.0, %v256
      %v261 = vadd.f32 %v254, 1.0
      %v262 = vadd.f32 %v256, 1.0
      %v263 = vrcp.pop %v261
      %v264 = vmul.f32 %v261, %v263
      %v265 = vsub.f32 1.0, %v264
      %v266 = vmul.f32 %v263, %v265
      %v267 = vadd.f32 %v263, %v266
      %vm268 = vweird.f32 %v261
      %vm269 = vweird.f32 %v263
      %vm270 = vmor %vm268, %vm269
      %v271 = vsel %vm270, %v263, %v267
      %v272 = vand.u32 2147483647, %v261
      %vm273 = vcmp.eq.f32.partialorder %v272, 8.507059e+37
      %v274 = vand.u32 %v261, 2147483648
      %v275 = vor.u32 1.1754944e-38, %v274
      %v276 = vsel %vm273, %v275, %v271
      %v277 = vmul.f32 %v259, %v276
      %v278 = vrcp.pop %v262
      %v279 = vmul.f32 %v262, %v278
      %v280 = vsub.f32 1.0, %v279
      %v281 = vmul.f32 %v278, %v280
      %v282 = vadd.f32 %v278, %v281
      %vm283 = vweird.f32 %v262
      %vm284 = vweird.f32 %v278
      %vm285 = vmor %vm283, %vm284
      %v286 = vsel %vm285, %v278, %v282
      %v287 = vand.u32 2147483647, %v262
      %vm288 = vcmp.eq.f32.partialorder %v287, 8.507059e+37
      %v289 = vand.u32 %v262, 2147483648
      %v290 = vor.u32 1.1754944e-38, %v289
      %v291 = vsel %vm288, %v290, %v286
      %v292 = vmul.f32 %v260, %v291
      %v293 = vmax.f32 %v243, 0.0
      %v294 = vmax.f32 %v244, 0.0
      %v295 = vmul.f32 %v243, %v247
      %v296 = vmul.f32 %v244, %v248
      %v297 = vsub.f32 %v293, %v295
      %v298 = vsub.f32 %v294, %v296
      %v299 = vadd.f32 %v254, 1.0
      %v300 = vlog2.pop %v299
      %v301 = vmul.f32 %v300, 0.6931472
      %v302 = vmul.f32 -0.5, %v254
      %v303 = vadd.f32 %v302, 1.0
      %v304 = vmul.f32 %v303, %v254
      %v305 = vand.u32 2147483647, %v254
      %vm306 = vcmp.lt.f32.partialorder %v305, 0.0004427343
      %v307 = vsel %vm306, %v304, %v301
      %v308 = vadd.f32 %v256, 1.0
      %v309 = vlog2.pop %v308
      %v310 = vmul.f32 %v309, 0.6931472
      %v311 = vmul.f32 -0.5, %v256
      %v312 = vadd.f32 %v311, 1.0
      %v313 = vmul.f32 %v312, %v256
      %v314 = vand.u32 2147483647, %v256
      %vm315 = vcmp.lt.f32.partialorder %v314, 0.0004427343
      %v316 = vsel %vm315, %v313, %v310
      %v317 = vadd.f32 %v297, %v307
      %v318 = vadd.f32 %v298, %v316
      %v319 = vld [vmem:[%s221] sm:$0xff]
      %v320 = vmul.f32 %v247, %v277
      %v321 = vmul.f32 %v248, %v292
      %v322 = vadd.f32 %v320, %v321
      %v323 = vadd.f32 %v319, %v322
      %324 = vst [vmem:[%s221] sm:$0xff] %v323
      %s325 = scalar_lea.vmem %s221, 8
      %v326 = vld [vmem:[%s325] sm:$0xff]
      %v327 = vadd.f32 %v277, %v292
      %v328 = vadd.f32 %v326, %v327
      %329 = vst [vmem:[%s325] sm:$0xff] %v328
      %s330 = scalar_lea.vmem %s221, 16
      %v331 = vld [vmem:[%s330] sm:$0xff]
      %v332 = vadd.f32 %v247, %v248
      %v333 = vadd.f32 %v331, %v332
      %334 = vst [vmem:[%s330] sm:$0xff] %v333
      %s335 = scalar_lea.vmem %s221, 24
      %v336 = vld [vmem:[%s335] sm:$0xff]
      %v337 = vadd.f32 %v317, %v318
      %v338 = vadd.f32 %v336, %v337
      %339 = vst [vmem:[%s335] sm:$0xff] %v338
      %s340 = smul.u32 4, %s17
      %p341 = scmp.lt.s32.totalorder %s340, 7
      %s342 = scalar_select %p341, %s340, 7
      %s343 = smul.addr %s342, 8
      %s344 = scalar_lea.vmem %s2, %s343
      // Predicated region
      $region33: #{bce_dice_loss.1} parent=27 // pred_check
        %p345 = pneg %p107
      $region34: #{bce_dice_loss.1} parent=27 // pred_check_branch
        %347 = sbr.rel (%p345) target = $region36
      $region35: #{bce_dice_loss.1} parent=27 // pred_region
        %s348 = smul.u32 4, %s17
      $region36: #{bce_dice_loss.1} parent=27 // pred_fallthru
        _
    $region28: #{bce_dice_loss.1} parent=5 // pred_fallthru
      _
    %p349 = scmp.le.s32.totalorder 2, %s8
    // Predicated region
    $region37: #{bce_dice_loss.1} parent=5 // pred_check
      %p350 = pneg %p349
    $region38: #{bce_dice_loss.1} parent=5 // pred_check_branch
      %352 = sbr.rel (%p350) target = $region40
    $region39: #{bce_dice_loss.1} parent=5 // pred_region
      %s353 = ssub.s32 %s8, 2
      // Predicated region
      $region41: #{bce_dice_loss.1} parent=39 // pred_check
        %p354 = pneg %p113
      $region42: #{bce_dice_loss.1} parent=39 // pred_check_branch
        %356 = sbr.rel (%p354) target = $region44
      $region43: #{bce_dice_loss.1} parent=39 // pred_region
        %s357 = smul.u32 4, %s19
        %p358 = scmp.lt.s32.totalorder %s357, 7
        %s359 = scalar_select %p358, %s357, 7
        %s360 = smul.addr %s359, 8
        %s361 = scalar_lea.vmem %s2, %s360
      $region44: #{bce_dice_loss.1} parent=39 // pred_fallthru
        _
    $region40: #{bce_dice_loss.1} parent=5 // pred_fallthru
      _
  $region6: #{bce_dice_loss.1} parent=0 // loop_footer
    %s12 = sadd.s32 1, %s8
  $region7: #{bce_dice_loss.1} parent=0 // loop_footer_branch
    %7 = sbr.rel target = $region3
  $region8: #{bce_dice_loss.1} parent=0 // loop_exit
    _

</llo_original>
